<compile_context>
chip_gen: v7x
topology: tpu7x:2x2x1
jax: 0.10.0
libtpu: 0.0.40
codegen_flags: <defaults>
</compile_context>

<pallas_src>
import functools

import jax
import jax.numpy as jnp
from jax.experimental import pallas as pl
from jax.experimental.pallas import tpu as pltpu


_SIGMAS = [0.26, 0.25, 0.25, 0.35, 0.35, 0.79, 0.79, 0.72, 0.72, 0.62,
           0.62, 1.07, 1.07, 0.87, 0.87, 0.89, 0.89]

_LANE = 128
_SUB = 8


def _round_up(x, m):
    return (x + m - 1) // m * m


def _cdiv(a, b):
    return (a + b - 1) // b


@functools.lru_cache(maxsize=1)
def _vmem_limit_bytes():
    """Generation-aware scoped-VMEM limit (v7x has 64 MiB, v5e/v6e 128 MiB)."""
    cap = None
    try:
        info = pltpu.get_tpu_info()
        cap = int(getattr(info, "vmem_capacity_bytes", 0)) or None
    except Exception:
        cap = None
    if cap is None:
        cap = 64 * 1024 * 1024          # assume the smallest (v7x-sized) part
    # Leave ~1/4 of physical VMEM as headroom, never request more than 96 MiB.
    return int(min(cap * 3 // 4, 96 * 1024 * 1024))


def _block_dims(rows, cols, itemsize, vmem_limit, cap_elems):
    """Pick (tr, tc): lane-aligned, as big as the VMEM budget safely allows."""
    budget = max(vmem_limit - 4 * 1024 * 1024, 4 * 1024 * 1024)
    # Per-element VMEM: 3 inputs x 2 pipeline buffers x itemsize, plus ~10
    # live f32 element-wise temporaries materialized inside the kernel body.
    target = budget // (6 * itemsize + 40)
    target = max(min(target, 1 << 20), _SUB * _LANE)
    if cap_elems is not None:                     # test hook: force small tiles
        target = max(min(target, int(cap_elems)), _SUB * _LANE)
    tc = min(_round_up(cols, _LANE), max(_LANE, (target // _SUB) // _LANE * _LANE))
    tr = min(_round_up(rows, _SUB), max(_SUB, (target // tc) // _SUB * _SUB))
    return tr, tc


def _make_kernel(*, with_scale, needs_mask, split_rows, half, gi, gj,
                 tr, tc, rows, cols):
    """Builds the kernel; all tiling facts are baked in statically."""

    def kernel(*refs):
        if with_scale:
            feat_ref, hm_ref, w_ref, s_ref, loss_ref, cnt_ref = refs
        else:
            feat_ref, hm_ref, w_ref, loss_ref, cnt_ref = refs
            s_ref = None

        p = pl.program_id(0)       # megacore split (parallel)
        i = pl.program_id(1)       # row blocks (arbitrary)
        j = pl.program_id(2)       # col blocks (arbitrary)

        # Each core's accumulator block is initialized at its first (i, j).
        @pl.when(jnp.logical_and(i == 0, j == 0))
        def _():
            loss_ref[...] = jnp.zeros_like(loss_ref)
            cnt_ref[...] = jnp.zeros_like(cnt_ref)

        x = feat_ref[...].astype(jnp.float32)
        hm = hm_ref[...].astype(jnp.float32)
        w = w_ref[...].astype(jnp.float32)

        rb = None
        block_ok = None
        if needs_mask:
            # Logical (unclamped) block index along the split axis; clamped
            # copies match the index_map so global element ids are correct.
            if split_rows:
                rb_log = p * half + i
                rb = jnp.minimum(rb_log, gi - 1)
                cb = j
                block_ok = rb_log < gi
            else:
                cb_log = p * half + j
                cb = jnp.minimum(cb_log, gj - 1)
                rb = i
                block_ok = cb_log < gj
            row_ids = rb * tr + jax.lax.broadcasted_iota(jnp.int32, (tr, tc), 0)
            col_ids = cb * tc + jax.lax.broadcasted_iota(jnp.int32, (tr, tc), 1)
            valid = jnp.logical_and(
                jnp.logical_and(row_ids < rows, col_ids < cols), block_ok)
            zero = jnp.float32(0.0)
            # Mask BEFORE the exp/log math so ragged-tail garbage never NaNs.
            x = jnp.where(valid, x, zero)
            hm = jnp.where(valid, hm, zero)
            w = jnp.where(valid, w, zero)

        # Stable log-sigmoid, 2 transcendentals / element:
        #   log(p)   = min(x,0) - log(1 + exp(-|x|))
        #   log(1-p) = log(p) - x
        #   p        = sigmoid(x) via one exact divide (shares the exp).
        z = jnp.exp(-jnp.abs(x))
        one_pz = 1.0 + z
        log_p = jnp.minimum(x, 0.0) - jnp.log(one_pz)
        log_1mp = log_p - x
        inv = 1.0 / one_pz
        pfeat = jnp.where(x >= 0.0, inv, z * inv)

        pos_inds = jnp.where(hm == 1.0, w, 0.0)     # heatmap.eq(1) * weight
        neg_inds = jnp.where(hm < 1.0, w, 0.0)      # heatmap.lt(1) * weight
        omh = 1.0 - hm
        omh2 = omh * omh
        neg_weights = omh2 * omh2                   # (1 - hm)^4
        omp = 1.0 - pfeat

        tile_loss = (log_p * (omp * omp) * pos_inds
                     + log_1mp * (pfeat * pfeat) * neg_weights * neg_inds)

        if with_scale:
            s = s_ref[...].astype(jnp.float32)      # (tr, 1) per-row sigma
            if needs_mask:
                r1 = rb * tr + jax.lax.broadcasted_iota(jnp.int32, (tr, 1), 0)
                svalid = jnp.logical_and(r1 < rows, block_ok)
                s = jnp.where(svalid, s, 0.0)
            tile_loss = tile_loss * s

        # Per-step sublane reduce into tiny per-core (1, 1, tc) accumulators.
        loss_ref[...] += jnp.sum(tile_loss, axis=0, keepdims=True)[None]
        cnt_ref[...] += jnp.sum(pos_inds, axis=0, keepdims=True)[None]

    return kernel


@functools.partial(jax.jit,
                   static_argnames=("weight", "with_sigmas", "block_elems_cap"))
def heatmap_loss(heatmap_feat, heatmap, heatmap_weight, *, weight=1.0,
                 with_sigmas=False, block_elems_cap=None):
    """Pallas implementation of HeatmapLoss.forward.

    heatmap_feat, heatmap, heatmap_weight: (B, C, H, W) arrays (NCHW), any
    floating dtype (streamed in native dtype, upcast per-tile).
    Returns a float32 scalar.
    """
    B, C, H, W = heatmap_feat.shape
    rows, cols = B * C, H * W

    feat2d = heatmap_feat.reshape(rows, cols)
    hm2d = heatmap.reshape(rows, cols)
    w2d = heatmap_weight.reshape(rows, cols)

    itemsize = max(a.dtype.itemsize for a in (feat2d, hm2d, w2d))
    vmem_limit = _vmem_limit_bytes()
    tr, tc = _block_dims(rows, cols, itemsize, vmem_limit, block_elems_cap)

    gi = _cdiv(rows, tr)
    gj = _cdiv(cols, tc)

    # Megacore split: cut the axis with more blocks across (up to) 2 cores.
    split_rows = gi >= gj
    nblocks_split = gi if split_rows else gj
    nsplit = 2 if nblocks_split >= 2 else 1
    half = _cdiv(nblocks_split, nsplit)

    needs_mask = ((rows % tr != 0) or (cols % tc != 0)
                  or (nsplit * half != nblocks_split))

    if split_rows:
        grid = (nsplit, half, gj)

        def rb_of(p, i, j):
            return jnp.minimum(p * half + i, gi - 1)

        def cb_of(p, i, j):
            return j
    else:
        grid = (nsplit, gi, half)

        def rb_of(p, i, j):
            return i

        def cb_of(p, i, j):
            return jnp.minimum(p * half + j, gj - 1)

    data_map = lambda p, i, j: (rb_of(p, i, j), cb_of(p, i, j))

    in_arrays = [feat2d, hm2d, w2d]
    in_specs = [pl.BlockSpec((tr, tc), data_map) for _ in range(3)]

    if with_sigmas:
        if C != len(_SIGMAS):
            raise ValueError("with_sigmas=True requires C == 17")
        sig = jnp.asarray(_SIGMAS, dtype=jnp.float32) / 10.0
        scale = jnp.broadcast_to(sig[None, :], (B, C)).reshape(rows, 1)
        in_arrays.append(scale)
        in_specs.append(pl.BlockSpec((tr, 1), lambda p, i, j: (rb_of(p, i, j), 0)))

    out_shape = tuple(
        jax.ShapeDtypeStruct((nsplit, 1, tc), jnp.float32) for _ in range(2))
    out_specs = tuple(
        pl.BlockSpec((1, 1, tc), lambda p, i, j: (p, 0, 0)) for _ in range(2))

    kernel = _make_kernel(
        with_scale=with_sigmas, needs_mask=needs_mask, split_rows=split_rows,
        half=half, gi=gi, gj=gj, tr=tr, tc=tc, rows=rows, cols=cols)

    loss_part, cnt_part = pl.pallas_call(
        kernel,
        out_shape=out_shape,
        grid_spec=pltpu.PrefetchScalarGridSpec(
            num_scalar_prefetch=0,
            grid=grid,
            in_specs=in_specs,
            out_specs=out_specs,
        ),
        compiler_params=pltpu.CompilerParams(
            dimension_semantics=("parallel", "arbitrary", "arbitrary"),
            vmem_limit_bytes=vmem_limit,
        ),
    )(*in_arrays)

    loss_sum = jnp.sum(loss_part)      # == pos_sum + neg_sum
    num_pos = jnp.sum(cnt_part)
    # pos_sum is identically 0 when num_pos == 0 (pos_inds all zero), so the
    # single expression reproduces both branches of the PyTorch module.
    den = jnp.where(num_pos == 0.0, 1.0, num_pos)
    return (-loss_sum / den) * jnp.float32(weight)


def _reference_loss(heatmap_feat, heatmap, heatmap_weight, weight=1.0,
                    with_sigmas=False):
    """Pure-JAX reference mirroring the PyTorch module."""
    p = jax.nn.sigmoid(heatmap_feat.astype(jnp.float32))
    hm = heatmap.astype(jnp.float32)
    w = heatmap_weight.astype(jnp.float32)
    pos_inds = (hm == 1.0).astype(jnp.float32) * w
    neg_inds = (hm < 1.0).astype(jnp.float32) * w
    neg_weights = (1.0 - hm) ** 4
    pos_loss = jnp.log(p) * (1.0 - p) ** 2 * pos_inds
    neg_loss = jnp.log(1.0 - p) * p ** 2 * neg_weights * neg_inds
    if with_sigmas:
        sigmas = jnp.array(_SIGMAS, dtype=jnp.float32) / 10.0
        pos_loss = pos_loss * sigmas[None, :, None, None]
        neg_loss = neg_loss * sigmas[None, :, None, None]
    num_pos = pos_inds.sum()
    pos_s = pos_loss.sum()
    neg_s = neg_loss.sum()
    loss = jnp.where(num_pos == 0.0, -neg_s,
                     -(pos_s + neg_s) / jnp.where(num_pos == 0.0, 1.0, num_pos))
    return loss * weight


def _make_inputs(key, shape, peak_thresh):
    k1, k2, k3 = jax.random.split(key, 3)
    feat = jax.random.normal(k1, shape, dtype=jnp.float32)
    hm = jax.random.uniform(k2, shape, dtype=jnp.float32)
    peaks = (jax.random.uniform(k3, shape) > peak_thresh).astype(jnp.float32)
    heatmap = jnp.where(peaks == 1.0, 1.0, hm * 0.9)
    hw = jnp.ones(shape, dtype=jnp.float32)
    return feat, heatmap, hw


if __name__ == "__main__":
    key = jax.random.PRNGKey(0)
    keys = jax.random.split(key, 5)

    # 1) default path, single block.
    f1, h1, w1 = _make_inputs(keys[0], (2, 4, 16, 16), 0.95)
    out1 = jax.block_until_ready(heatmap_loss(f1, h1, w1, weight=1.0))
    ref1 = _reference_loss(f1, h1, w1)
    assert jnp.allclose(out1, ref1, rtol=1e-4, atol=1e-5), (out1, ref1)

    # 2) with_sigmas path (17 keypoint channels), ragged row tile (17 rows).
    f2, h2, w2 = _make_inputs(keys[1], (1, 17, 8, 16), 0.9)
    out2 = jax.block_until_ready(
        heatmap_loss(f2, h2, w2, weight=2.0, with_sigmas=True))
    ref2 = _reference_loss(f2, h2, w2, weight=2.0, with_sigmas=True)
    assert jnp.allclose(out2, ref2, rtol=1e-4, atol=1e-5), (out2, ref2)

    # 3) forced multi-block path: 2-way split over column blocks, ragged rows
    #    (15) and ragged columns (400), in-kernel masking.
    f3, h3, w3 = _make_inputs(keys[2], (3, 5, 20, 20), 0.92)
    out3 = jax.block_until_ready(
        heatmap_loss(f3, h3, w3, weight=1.0, block_elems_cap=1024))
    ref3 = _reference_loss(f3, h3, w3)
    assert jnp.allclose(out3, ref3, rtol=1e-4, atol=1e-5), (out3, ref3)

    # 4) forced odd block count along the split axis: exercises the per-core
    #    block gating (duplicate tail block contributes exactly zero).
    f4, h4, w4 = _make_inputs(keys[3], (2, 8, 16, 24), 0.93)
    out4 = jax.block_until_ready(
        heatmap_loss(f4, h4, w4, weight=1.0, block_elems_cap=1024))
    ref4 = _reference_loss(f4, h4, w4)
    assert jnp.allclose(out4, ref4, rtol=1e-4, atol=1e-5), (out4, ref4)

    # 5) num_pos == 0 branch (no exact-1 peaks) with the merged accumulator.
    f5, h5, w5 = _make_inputs(keys[4], (2, 4, 16, 16), 2.0)  # threshold>1: no peaks
    out5 = jax.block_until_ready(heatmap_loss(f5, h5, w5, weight=1.0))
    ref5 = _reference_loss(f5, h5, w5)
    assert jnp.allclose(out5, ref5, rtol=1e-4, atol=1e-5), (out5, ref5)

    print("KERNEL_OK")
</pallas_src>

<mosaic_0001>
module attributes {stable_mosaic.version = 11 : i64} {
  func.func @kernel(%arg0: i32, %arg1: i32, %arg2: i32, %arg3: memref<8x256xf32, #tpu.memory_space<vmem>>, %arg4: memref<8x256xf32, #tpu.memory_space<vmem>>, %arg5: memref<8x256xf32, #tpu.memory_space<vmem>>, %arg6: memref<1x1x256xf32, #tpu.memory_space<vmem>>, %arg7: memref<1x1x256xf32, #tpu.memory_space<vmem>>) attributes {dimension_semantics = [#tpu.dimension_semantics<parallel>, #tpu.dimension_semantics<arbitrary>, #tpu.dimension_semantics<arbitrary>], iteration_bounds = array<i64: 1, 1, 1>, scalar_prefetch = 0 : i64, scratch_operands = 0 : i64, tpu.core_type = #tpu.core_type<tc>, window_params = [{transform_indices = @transform_0, window_bounds = array<i64: 8, 256>}, {transform_indices = @transform_1, window_bounds = array<i64: 8, 256>}, {transform_indices = @transform_2, window_bounds = array<i64: 8, 256>}, {transform_indices = @transform_3, window_bounds = array<i64: 1, 1, 256>}, {transform_indices = @transform_4, window_bounds = array<i64: 1, 1, 256>}]} {
    %c0_i32 = arith.constant 0 : i32
    %0 = arith.cmpi eq, %arg1, %c0_i32 : i32
    %c0_i32_0 = arith.constant 0 : i32
    %1 = arith.cmpi eq, %arg2, %c0_i32_0 : i32
    %2 = arith.andi %0, %1 : i1
    %3 = arith.extui %2 : i1 to i32
    %c0_i32_1 = arith.constant 0 : i32
    %4 = arith.cmpi ne, %3, %c0_i32_1 : i32
    scf.if %4 {
      %cst_31 = arith.constant 0.000000e+00 : f32
      %59 = vector.broadcast %cst_31 : f32 to vector<1x1x256xf32>
      %c0_32 = arith.constant 0 : index
      %c0_33 = arith.constant 0 : index
      %c0_34 = arith.constant 0 : index
      %60 = vector.load %arg6[%c0_32, %c0_33, %c0_34] : memref<1x1x256xf32, #tpu.memory_space<vmem>>, vector<1x1x256xf32>
      tpu.vector_store %arg6[%c0_32, %c0_33, %c0_34], %59 {strides = array<i32>} : memref<1x1x256xf32, #tpu.memory_space<vmem>>, vector<1x1x256xf32>,
      %cst_35 = arith.constant 0.000000e+00 : f32
      %61 = vector.broadcast %cst_35 : f32 to vector<1x1x256xf32>
      %c0_36 = arith.constant 0 : index
      %c0_37 = arith.constant 0 : index
      %c0_38 = arith.constant 0 : index
      %62 = vector.load %arg7[%c0_36, %c0_37, %c0_38] : memref<1x1x256xf32, #tpu.memory_space<vmem>>, vector<1x1x256xf32>
      tpu.vector_store %arg7[%c0_36, %c0_37, %c0_38], %61 {strides = array<i32>} : memref<1x1x256xf32, #tpu.memory_space<vmem>>, vector<1x1x256xf32>,
    } else {
    }
    %c0 = arith.constant 0 : index
    %c0_2 = arith.constant 0 : index
    %5 = vector.load %arg3[%c0, %c0_2] : memref<8x256xf32, #tpu.memory_space<vmem>>, vector<8x256xf32>
    %c0_3 = arith.constant 0 : index
    %c0_4 = arith.constant 0 : index
    %6 = vector.load %arg4[%c0_3, %c0_4] : memref<8x256xf32, #tpu.memory_space<vmem>>, vector<8x256xf32>
    %c0_5 = arith.constant 0 : index
    %c0_6 = arith.constant 0 : index
    %7 = vector.load %arg5[%c0_5, %c0_6] : memref<8x256xf32, #tpu.memory_space<vmem>>, vector<8x256xf32>
    %8 = math.absf %5 : vector<8x256xf32>
    %cst = arith.constant 0.000000e+00 : f32
    %9 = vector.broadcast %cst : f32 to vector<8x256xf32>
    %10 = arith.subf %9, %8 : vector<8x256xf32>
    %11 = math.exp %10 : vector<8x256xf32>
    %cst_7 = arith.constant 1.000000e+00 : f32
    %12 = vector.broadcast %cst_7 : f32 to vector<8x256xf32>
    %13 = arith.addf %12, %11 : vector<8x256xf32>
    %cst_8 = arith.constant 0.000000e+00 : f32
    %14 = vector.broadcast %cst_8 : f32 to vector<8x256xf32>
    %15 = arith.minimumf %5, %14 : vector<8x256xf32>
    %16 = math.log %13 : vector<8x256xf32>
    %17 = arith.subf %15, %16 : vector<8x256xf32>
    %18 = arith.subf %17, %5 : vector<8x256xf32>
    %cst_9 = arith.constant 1.000000e+00 : f32
    %19 = vector.broadcast %cst_9 : f32 to vector<8x256xf32>
    %20 = arith.divf %19, %13 : vector<8x256xf32>
    %cst_10 = arith.constant 0.000000e+00 : f32
    %21 = vector.broadcast %cst_10 : f32 to vector<8x256xf32>
    %22 = arith.cmpf oge, %5, %21 : vector<8x256xf32>
    %23 = arith.mulf %11, %20 : vector<8x256xf32>
    %24 = arith.select %22, %20, %23 : vector<8x256xi1>, vector<8x256xf32>
    %cst_11 = arith.constant 1.000000e+00 : f32
    %25 = vector.broadcast %cst_11 : f32 to vector<8x256xf32>
    %26 = arith.cmpf oeq, %6, %25 : vector<8x256xf32>
    %cst_12 = arith.constant 0.000000e+00 : f32
    %27 = vector.broadcast %cst_12 : f32 to vector<8x256xf32>
    %28 = arith.select %26, %7, %27 : vector<8x256xi1>, vector<8x256xf32>
    %cst_13 = arith.constant 1.000000e+00 : f32
    %29 = vector.broadcast %cst_13 : f32 to vector<8x256xf32>
    %30 = arith.cmpf olt, %6, %29 : vector<8x256xf32>
    %cst_14 = arith.constant 0.000000e+00 : f32
    %31 = vector.broadcast %cst_14 : f32 to vector<8x256xf32>
    %32 = arith.select %30, %7, %31 : vector<8x256xi1>, vector<8x256xf32>
    %cst_15 = arith.constant 1.000000e+00 : f32
    %33 = vector.broadcast %cst_15 : f32 to vector<8x256xf32>
    %34 = arith.subf %33, %6 : vector<8x256xf32>
    %35 = arith.mulf %34, %34 : vector<8x256xf32>
    %36 = arith.mulf %35, %35 : vector<8x256xf32>
    %cst_16 = arith.constant 1.000000e+00 : f32
    %37 = vector.broadcast %cst_16 : f32 to vector<8x256xf32>
    %38 = arith.subf %37, %24 : vector<8x256xf32>
    %39 = arith.mulf %38, %38 : vector<8x256xf32>
    %40 = arith.mulf %17, %39 : vector<8x256xf32>
    %41 = arith.mulf %40, %28 : vector<8x256xf32>
    %42 = arith.mulf %24, %24 : vector<8x256xf32>
    %43 = arith.mulf %18, %42 : vector<8x256xf32>
    %44 = arith.mulf %43, %36 : vector<8x256xf32>
    %45 = arith.mulf %44, %32 : vector<8x256xf32>
    %46 = arith.addf %41, %45 : vector<8x256xf32>
    %c0_17 = arith.constant 0 : index
    %c0_18 = arith.constant 0 : index
    %c0_19 = arith.constant 0 : index
    %47 = vector.load %arg6[%c0_17, %c0_18, %c0_19] : memref<1x1x256xf32, #tpu.memory_space<vmem>>, vector<1x1x256xf32>
    %cst_20 = arith.constant dense<0.000000e+00> : vector<256xf32>
    %48 = vector.multi_reduction <add>, %46, %cst_20 [0] : vector<8x256xf32> to vector<256xf32>
    %49 = vector.shape_cast %48 : vector<256xf32> to vector<1x256xf32>
    %50 = vector.shape_cast %49 : vector<1x256xf32> to vector<1x1x256xf32>
    %51 = arith.addf %47, %50 : vector<1x1x256xf32>
    %c0_21 = arith.constant 0 : index
    %c0_22 = arith.constant 0 : index
    %c0_23 = arith.constant 0 : index
    %52 = vector.load %arg6[%c0_21, %c0_22, %c0_23] : memref<1x1x256xf32, #tpu.memory_space<vmem>>, vector<1x1x256xf32>
    tpu.vector_store %arg6[%c0_21, %c0_22, %c0_23], %51 {strides = array<i32>} : memref<1x1x256xf32, #tpu.memory_space<vmem>>, vector<1x1x256xf32>,
    %c0_24 = arith.constant 0 : index
    %c0_25 = arith.constant 0 : index
    %c0_26 = arith.constant 0 : index
    %53 = vector.load %arg7[%c0_24, %c0_25, %c0_26] : memref<1x1x256xf32, #tpu.memory_space<vmem>>, vector<1x1x256xf32>
    %cst_27 = arith.constant dense<0.000000e+00> : vector<256xf32>
    %54 = vector.multi_reduction <add>, %28, %cst_27 [0] : vector<8x256xf32> to vector<256xf32>
    %55 = vector.shape_cast %54 : vector<256xf32> to vector<1x256xf32>
    %56 = vector.shape_cast %55 : vector<1x256xf32> to vector<1x1x256xf32>
    %57 = arith.addf %53, %56 : vector<1x1x256xf32>
    %c0_28 = arith.constant 0 : index
    %c0_29 = arith.constant 0 : index
    %c0_30 = arith.constant 0 : index
    %58 = vector.load %arg7[%c0_28, %c0_29, %c0_30] : memref<1x1x256xf32, #tpu.memory_space<vmem>>, vector<1x1x256xf32>
    tpu.vector_store %arg7[%c0_28, %c0_29, %c0_30], %57 {strides = array<i32>} : memref<1x1x256xf32, #tpu.memory_space<vmem>>, vector<1x1x256xf32>,
    return
  }
  func.func @transform_0(%arg0: i32, %arg1: i32, %arg2: i32) -> (i32, i32) {
    %c1_i32 = arith.constant 1 : i32
    %0 = arith.muli %arg0, %c1_i32 : i32
    %1 = arith.addi %0, %arg1 : i32
    %c0_i32 = arith.constant 0 : i32
    %2 = arith.minsi %1, %c0_i32 : i32
    %c0_i32_0 = arith.constant 0 : i32
    return %2, %arg2 : i32, i32
  }
  func.func @transform_1(%arg0: i32, %arg1: i32, %arg2: i32) -> (i32, i32) {
    %c1_i32 = arith.constant 1 : i32
    %0 = arith.muli %arg0, %c1_i32 : i32
    %1 = arith.addi %0, %arg1 : i32
    %c0_i32 = arith.constant 0 : i32
    %2 = arith.minsi %1, %c0_i32 : i32
    %c0_i32_0 = arith.constant 0 : i32
    return %2, %arg2 : i32, i32
  }
  func.func @transform_2(%arg0: i32, %arg1: i32, %arg2: i32) -> (i32, i32) {
    %c1_i32 = arith.constant 1 : i32
    %0 = arith.muli %arg0, %c1_i32 : i32
    %1 = arith.addi %0, %arg1 : i32
    %c0_i32 = arith.constant 0 : i32
    %2 = arith.minsi %1, %c0_i32 : i32
    %c0_i32_0 = arith.constant 0 : i32
    return %2, %arg2 : i32, i32
  }
  func.func @transform_3(%arg0: i32, %arg1: i32, %arg2: i32) -> (i32, i32, i32) {
    %c0_i32 = arith.constant 0 : i32
    %c0_i32_0 = arith.constant 0 : i32
    %c0_i32_1 = arith.constant 0 : i32
    return %arg0, %c0_i32, %c0_i32_0 : i32, i32, i32
  }
  func.func @transform_4(%arg0: i32, %arg1: i32, %arg2: i32) -> (i32, i32, i32) {
    %c0_i32 = arith.constant 0 : i32
    %c0_i32_0 = arith.constant 0 : i32
    %c0_i32_1 = arith.constant 0 : i32
    return %arg0, %c0_i32, %c0_i32_0 : i32, i32, i32
  }
}

</mosaic_0001>

<llo_original>
// kernel: heatmap_loss.1
$region0: #{heatmap_loss.1}
  #allocation0 [shape = 'u32[]', space=smem, size = 0x4, offset = 0x4, fixed_abs, tag = 'smem constant byte address 0x4 - core index']
  #allocation1 [shape = 'u32[144,128]{1,0:T(1,128)}', space=vmem, size = 0x12000, scoped, tag = 'internal scratch']
  %s0 = inlined_call_operand.vmem [shape: f32[8,256], index: 0, kind: input, shape index: {}]
  %s1 = inlined_call_operand.vmem [shape: f32[8,256], index: 1, kind: input, shape index: {}]
  %s2 = inlined_call_operand.vmem [shape: f32[8,256], index: 2, kind: input, shape index: {}]
  %s3 = inlined_call_operand.vmem [shape: f32[1,1,256], index: 3, kind: output, shape index: {0}]
  %s4 = inlined_call_operand.vmem [shape: f32[1,1,256], index: 4, kind: output, shape index: {1}]
  %5 = xla_tuple %s3, %s4
  %s6 = sld [smem:[#allocation0]]
  $region34: #{heatmap_loss.1} parent=0
    _
  %s8 = ssub.s32 1, %s6
  %s9 = scalar_select 0, %s8, %s6
  // Predicated region
  $region2: #{heatmap_loss.1} parent=0 // pred_check
    _
  $region3: #{heatmap_loss.1} parent=0 // pred_check_branch
    %11 = sbr.rel (0) target = $region5
  $region4: #{heatmap_loss.1} parent=0 // pred_region
    %s12 = sadd.s32 0, 0
    %p13 = scmp.lt.s32.totalorder %s12, 0
    %s14 = scalar_select %p13, %s12, 0
    %p15 = scmp.lt.s32.totalorder %s14, 0
    %s16 = scalar_select %p15, %s14, 0
    %s17 = smul.addr %s16, 2
    %s18 = smul.addr %s17, 8
    %s19 = scalar_lea.vmem %s0, %s18
    %s20 = sadd.s32 0, 0
    %p21 = scmp.lt.s32.totalorder %s20, 0
    %s22 = scalar_select %p21, %s20, 0
  $region5: #{heatmap_loss.1} parent=0 // pred_fallthru
    _
  // Predicated region
  $region6: #{heatmap_loss.1} parent=0 // pred_check
    _
  $region7: #{heatmap_loss.1} parent=0 // pred_check_branch
    %24 = sbr.rel (0) target = $region9
  $region8: #{heatmap_loss.1} parent=0 // pred_region
    %s25 = sadd.s32 0, 0
    %p26 = scmp.lt.s32.totalorder %s25, 0
    %s27 = scalar_select %p26, %s25, 0
    %p28 = scmp.lt.s32.totalorder %s27, 0
    %s29 = scalar_select %p28, %s27, 0
    %s30 = smul.addr %s29, 2
    %s31 = smul.addr %s30, 8
    %s32 = scalar_lea.vmem %s1, %s31
    %s33 = sadd.s32 0, 0
    %p34 = scmp.lt.s32.totalorder %s33, 0
    %s35 = scalar_select %p34, %s33, 0
  $region9: #{heatmap_loss.1} parent=0 // pred_fallthru
    _
  // Predicated region
  $region10: #{heatmap_loss.1} parent=0 // pred_check
    _
  $region11: #{heatmap_loss.1} parent=0 // pred_check_branch
    %37 = sbr.rel (0) target = $region13
  $region12: #{heatmap_loss.1} parent=0 // pred_region
    %s38 = sadd.s32 0, 0
    %p39 = scmp.lt.s32.totalorder %s38, 0
    %s40 = scalar_select %p39, %s38, 0
    %p41 = scmp.lt.s32.totalorder %s40, 0
    %s42 = scalar_select %p41, %s40, 0
    %s43 = smul.addr %s42, 2
    %s44 = smul.addr %s43, 8
    %s45 = scalar_lea.vmem %s2, %s44
    %s46 = sadd.s32 0, 0
    %p47 = scmp.lt.s32.totalorder %s46, 0
    %s48 = scalar_select %p47, %s46, 0
  $region13: #{heatmap_loss.1} parent=0 // pred_fallthru
    _
  %s49 = sadd.s32 0, 0
  %p50 = scmp.lt.s32.totalorder %s49, 0
  %s51 = scalar_select %p50, %s49, 0
  %p52 = scmp.lt.s32.totalorder %s51, 0
  %s53 = scalar_select %p52, %s51, 0
  %s54 = smul.addr %s53, 2
  %s55 = smul.addr %s54, 8
  %s56 = scalar_lea.vmem %s0, %s55
  %s57 = sadd.s32 0, 0
  %p58 = scmp.lt.s32.totalorder %s57, 0
  %s59 = scalar_select %p58, %s57, 0
  %p60 = scmp.lt.s32.totalorder %s59, 0
  %s61 = scalar_select %p60, %s59, 0
  %s62 = smul.addr %s61, 2
  %s63 = smul.addr %s62, 8
  %s64 = scalar_lea.vmem %s1, %s63
  %s65 = sadd.s32 0, 0
  %p66 = scmp.lt.s32.totalorder %s65, 0
  %s67 = scalar_select %p66, %s65, 0
  %p68 = scmp.lt.s32.totalorder %s67, 0
  %s69 = scalar_select %p68, %s67, 0
  %s70 = smul.addr %s69, 2
  %s71 = smul.addr %s70, 8
  %s72 = scalar_lea.vmem %s2, %s71
  %s73 = sadd.s32 0, 0
  %p74 = scmp.lt.s32.totalorder %s73, 0
  %s75 = scalar_select %p74, %s73, 0
  %p76 = scmp.lt.s32.totalorder %s75, 0
  %s77 = scalar_select %p76, %s75, 0
  %s78 = smul.addr %s77, 2
  %s79 = smul.addr %s78, 8
  %s80 = scalar_lea.vmem %s0, %s79
  %s81 = sadd.s32 0, 0
  %p82 = scmp.lt.s32.totalorder %s81, 0
  %s83 = scalar_select %p82, %s81, 0
  %s84 = sadd.s32 0, 0
  %p85 = scmp.lt.s32.totalorder %s84, 0
  %s86 = scalar_select %p85, %s84, 0
  %p87 = scmp.lt.s32.totalorder %s86, 0
  %s88 = scalar_select %p87, %s86, 0
  %s89 = smul.addr %s88, 2
  %s90 = smul.addr %s89, 8
  %s91 = scalar_lea.vmem %s1, %s90
  %s92 = sadd.s32 0, 0
  %p93 = scmp.lt.s32.totalorder %s92, 0
  %s94 = scalar_select %p93, %s92, 0
  %s95 = sadd.s32 0, 0
  %p96 = scmp.lt.s32.totalorder %s95, 0
  %s97 = scalar_select %p96, %s95, 0
  %p98 = scmp.lt.s32.totalorder %s97, 0
  %s99 = scalar_select %p98, %s97, 0
  %s100 = smul.addr %s99, 2
  %s101 = smul.addr %s100, 8
  %s102 = scalar_lea.vmem %s2, %s101
  %s103 = sadd.s32 0, 0
  %p104 = scmp.lt.s32.totalorder %s103, 0
  %s105 = scalar_select %p104, %s103, 0
  %p106 = scmp.eq.s32.totalorder 0, 0
  %p107 = scmp.eq.s32.totalorder 0, 0
  %p108 = pnand %p106, %p107
  %p109 = pneg %p108
  // Predicated region
  $region14: #{heatmap_loss.1} parent=0 // pred_check
    _
  $region15: #{heatmap_loss.1} parent=0 // pred_check_branch
    %111 = sbr.rel (%p108) target = $region17
  $region16: #{heatmap_loss.1} parent=0 // pred_region
    %v112 = vlaneseq
    %vm113 = vcmp.ge.s32.totalorder %v112, 0
    %vm114 = vcmp.lt.s32.totalorder %v112, 256
    %vm115 = vmand %vm113, %vm114
    %116 = vst.msk [vmem:[%s3] sm:$0x3] %vm115, 0.0
    %117 = vst.msk [vmem:[%s4] sm:$0x3] %vm115, 0.0
  $region17: #{heatmap_loss.1} parent=0 // pred_fallthru
    _
  %v118 = vld [vmem:[%s80] sm:$0xff]
  %v119 = vld [vmem:[%s80 + $0x8] sm:$0xff]
  %v120 = vld [vmem:[%s91] sm:$0xff]
  %v121 = vld [vmem:[%s91 + $0x8] sm:$0xff]
  %v122 = vld [vmem:[%s102] sm:$0xff]
  %v123 = vld [vmem:[%s102 + $0x8] sm:$0xff]
  %v124 = vand.u32 2147483647, %v118
  %v125 = vand.u32 2147483647, %v119
  %v126 = vsub.f32 0.0, %v124
  %v127 = vsub.f32 0.0, %v125
  %v128 = vmul.f32 %v126, 1.442695
  %v129 = vpow.pop %v128
  %v130 = vmul.f32 %v127, 1.442695
  %v131 = vpow.pop %v130
  %v132 = vadd.f32 %v129, 1.0
  %v133 = vadd.f32 %v131, 1.0
  %v134 = vmin.f32 %v118, 0.0
  %v135 = vmin.f32 %v119, 0.0
  %v136 = vlog2.pop %v132
  %v137 = vmul.f32 %v136, 0.6931472
  %v138 = vlog2.pop %v133
  %v139 = vmul.f32 %v138, 0.6931472
  %v140 = vsub.f32 %v134, %v137
  %v141 = vsub.f32 %v135, %v139
  %v142 = vsub.f32 %v140, %v118
  %v143 = vsub.f32 %v141, %v119
  %v144 = vrcp.pop %v132
  %v145 = vmul.f32 1.0, %v144
  %v146 = vrcp.pop %v133
  %v147 = vmul.f32 1.0, %v146
  %vm148 = vcmp.ge.f32.partialorder %v118, 0.0
  %vm149 = vcmp.ge.f32.partialorder %v119, 0.0
  %v150 = vmul.f32 %v129, %v145
  %v151 = vmul.f32 %v131, %v147
  %v152 = vsel %vm148, %v145, %v150
  %v153 = vsel %vm149, %v147, %v151
  %vm154 = vcmp.eq.f32.partialorder %v120, 1.0
  %vm155 = vcmp.eq.f32.partialorder %v121, 1.0
  %v156 = vsel %vm154, %v122, 0.0
  %v157 = vsel %vm155, %v123, 0.0
  %vm158 = vcmp.lt.f32.partialorder %v120, 1.0
  %vm159 = vcmp.lt.f32.partialorder %v121, 1.0
  %v160 = vsel %vm158, %v122, 0.0
  %v161 = vsel %vm159, %v123, 0.0
  %v162 = vsub.f32 1.0, %v120
  %v163 = vsub.f32 1.0, %v121
  %v164 = vmul.f32 %v162, %v162
  %v165 = vmul.f32 %v163, %v163
  %v166 = vmul.f32 %v164, %v164
  %v167 = vmul.f32 %v165, %v165
  %v168 = vsub.f32 1.0, %v152
  %v169 = vsub.f32 1.0, %v153
  %v170 = vmul.f32 %v168, %v168
  %v171 = vmul.f32 %v169, %v169
  %v172 = vmul.f32 %v140, %v170
  %v173 = vmul.f32 %v141, %v171
  %v174 = vmul.f32 %v172, %v156
  %v175 = vmul.f32 %v173, %v157
  %v176 = vmul.f32 %v152, %v152
  %v177 = vmul.f32 %v153, %v153
  %v178 = vmul.f32 %v142, %v176
  %v179 = vmul.f32 %v143, %v177
  %v180 = vmul.f32 %v178, %v166
  %v181 = vmul.f32 %v179, %v167
  %v182 = vmul.f32 %v180, %v160
  %v183 = vmul.f32 %v181, %v161
  %v184 = vadd.f32 %v174, %v182
  %v185 = vadd.f32 %v175, %v183
  %v186 = vld [vmem:[%s3] sm:$0x3]
  %v187 = vrot.slane %v184, 4
  %v188 = vadd.f32 %v184, %v187
  %v189 = vrot.slane %v188, 2
  %v190 = vadd.f32 %v188, %v189
  %v191 = vrot.slane %v190, 1
  %v192 = vadd.f32 %v190, %v191
  %v193 = vrot.slane %v185, 4
  %v194 = vadd.f32 %v185, %v193
  %v195 = vrot.slane %v194, 2
  %v196 = vadd.f32 %v194, %v195
  %v197 = vrot.slane %v196, 1
  %v198 = vadd.f32 %v196, %v197
  %v201 = vcombine.low %v192, %v198
  %v203 = vunpack.c.l.s4 1966171168
  %v204 = vunpack.c.0.s8 %v203
  %v205 = vlaneseq
  %v206 = vshrl.u32 %v205, 7
  %v207 = vsub.s32 %v204, %v206
  %v208 = vrot.slane %v201, %v207
  %v210 = vunpack.c.l.s4 1966171168
  %v211 = vunpack.c.0.s8 %v210
  %v212 = vlaneseq
  %v213 = vshrl.u32 %v212, 7
  %v214 = vsub.s32 %v211, %v213
  %v215 = vrot.slane %v208, %v214
  %v217 = vadd.f32 %v186, %v215
  %v218 = vlaneseq
  %vm219 = vcmp.ge.s32.totalorder %v218, 0
  %vm220 = vcmp.lt.s32.totalorder %v218, 256
  %vm221 = vmand %vm219, %vm220
  %222 = vst.msk [vmem:[%s3] sm:$0x3] %vm221, %v217
  %v223 = vld [vmem:[%s4] sm:$0x3]
  %v224 = vrot.slane %v156, 4
  %v225 = vadd.f32 %v156, %v224
  %v226 = vrot.slane %v225, 2
  %v227 = vadd.f32 %v225, %v226
  %v228 = vrot.slane %v227, 1
  %v229 = vadd.f32 %v227, %v228
  %v230 = vrot.slane %v157, 4
  %v231 = vadd.f32 %v157, %v230
  %v232 = vrot.slane %v231, 2
  %v233 = vadd.f32 %v231, %v232
  %v234 = vrot.slane %v233, 1
  %v235 = vadd.f32 %v233, %v234
  %v238 = vcombine.low %v229, %v235
  %v240 = vunpack.c.l.s4 1966171168
  %v241 = vunpack.c.0.s8 %v240
  %v242 = vlaneseq
  %v243 = vshrl.u32 %v242, 7
  %v244 = vsub.s32 %v241, %v243
  %v245 = vrot.slane %v238, %v244
  %v247 = vunpack.c.l.s4 1966171168
  %v248 = vunpack.c.0.s8 %v247
  %v249 = vlaneseq
  %v250 = vshrl.u32 %v249, 7
  %v251 = vsub.s32 %v248, %v250
  %v252 = vrot.slane %v245, %v251
  %v254 = vadd.f32 %v223, %v252
  %255 = vst.msk [vmem:[%s4] sm:$0x3] %vm221, %v254
  // Predicated region
  $region18: #{heatmap_loss.1} parent=0 // pred_check
    _
  $region19: #{heatmap_loss.1} parent=0 // pred_check_branch
    %257 = sbr.rel (0) target = $region21
  $region20: #{heatmap_loss.1} parent=0 // pred_region
    _
  $region21: #{heatmap_loss.1} parent=0 // pred_fallthru
    _
  // Predicated region
  $region22: #{heatmap_loss.1} parent=0 // pred_check
    _
  $region23: #{heatmap_loss.1} parent=0 // pred_check_branch
    %259 = sbr.rel (0) target = $region25
  $region24: #{heatmap_loss.1} parent=0 // pred_region
    _
  $region25: #{heatmap_loss.1} parent=0 // pred_fallthru
    _
  // Predicated region
  $region26: #{heatmap_loss.1} parent=0 // pred_check
    _
  $region27: #{heatmap_loss.1} parent=0 // pred_check_branch
    %261 = sbr.rel (0) target = $region29
  $region28: #{heatmap_loss.1} parent=0 // pred_region
    _
  $region29: #{heatmap_loss.1} parent=0 // pred_fallthru
    _
  // Predicated region
  $region30: #{heatmap_loss.1} parent=0 // pred_check
    _
  $region31: #{heatmap_loss.1} parent=0 // pred_check_branch
    %263 = sbr.rel (0) target = $region33
  $region32: #{heatmap_loss.1} parent=0 // pred_region
    _
  $region33: #{heatmap_loss.1} parent=0 // pred_fallthru
    _

</llo_original>
